<compile_context>
chip_gen: v7x
topology: tpu7x:2x2x1
jax: 0.10.0
libtpu: 0.0.40
codegen_flags: <defaults>
</compile_context>

<pallas_src>
import functools

import jax
import jax.numpy as jnp
from jax.experimental import pallas as pl
from jax.experimental.pallas import tpu as pltpu

_LANES = 128


def _round_up(x, m):
    return (x + m - 1) // m * m


def _tv_kernel(vmask_ref, hmask_ref, img_ref, out_ref, *, w, l_pad):
    # img_ref: (TB, L) lane-dense block of flattened (n, c) slices (native dtype).
    # vmask_ref / hmask_ref: (1, L) f32 0/1 masks (valid diff positions).
    # out_ref: (1, 2, 128) per-block partial sums (lane-dense full-block store).
    x = img_ref[...]
    # Shifted neighbours via cyclic rolls along the flat H*W axis (per row):
    #   shift = L - w  ->  neighbour one image-row down   (x[p + w])
    #   shift = L - 1  ->  neighbour one column to the right (x[p + 1])
    xv = pltpu.roll(x, shift=l_pad - w, axis=1)
    xh = pltpu.roll(x, shift=l_pad - 1, axis=1)
    # Masks kill wrapped / last-row / last-col / lane-padding positions, so the
    # block-local sums are exact.  Cast to f32 here (single upcast) and
    # accumulate in f32.
    av = jnp.abs(xv - x).astype(jnp.float32) * vmask_ref[...]
    ah = jnp.abs(xh - x).astype(jnp.float32) * hmask_ref[...]
    v_sum = jnp.sum(av)
    h_sum = jnp.sum(ah)
    row = jnp.concatenate(
        [jnp.full((1, _LANES), v_sum, jnp.float32),
         jnp.full((1, _LANES), h_sum, jnp.float32)], axis=0)   # (2, 128)
    out_ref[...] = row[None]                                    # (1, 2, 128)


def tv_loss(img, *, target_block_bytes=8 * 1024 * 1024):
    """Total-variation loss for an NCHW batch (same semantics as torch TVLoss)."""
    n, c, h, w = img.shape
    nc = n * c
    hw = h * w
    itemsize = jnp.dtype(img.dtype).itemsize
    sub = {1: 32, 2: 16}.get(itemsize, 8)          # sublane tile for this dtype

    l_pad = _round_up(hw, _LANES)                   # lane-padded flat width
    row_bytes = l_pad * itemsize                    # one fused slice in VMEM

    # ---- block sizing: (TB, L) blocks, TB a multiple of the sublane tile ----
    nc_pad = _round_up(nc, sub)
    tb = max(sub, (target_block_bytes // max(sub * row_bytes, 1)) * sub)
    if nc_pad >= 2 * sub:
        # Keep >= 2 grid blocks so the "parallel" axis can use both TCs on v7x.
        tb = min(tb, max(sub, (nc_pad // 2 // sub) * sub))
    tb = min(tb, nc_pad)
    num_blocks = pl.cdiv(nc_pad, tb)
    nc_pad = num_blocks * tb

    block_bytes = tb * row_bytes                    # true (padded) VMEM block size
    need = 2 * block_bytes + (4 << 20)              # double-buffered input + headroom
    vmem_limit = int(need if need > (40 << 20)
                     else min(max(need, 32 << 20), 40 << 20))
    # TODO(synk): for single slices with H*W*itemsize larger than the block
    # budget, also tile H in the grid (1-row halo) instead of raising the limit.

    # ---- flattened, padded input and precomputed validity masks ----
    x = img.reshape(nc, hw)
    if nc_pad != nc or l_pad != hw:
        # Zero padding contributes 0 to both masked abs-diff sums.
        x = jnp.pad(x, ((0, nc_pad - nc), (0, l_pad - hw)))

    pos = jnp.arange(l_pad, dtype=jnp.int32)
    vmask = (pos < (h - 1) * w).astype(jnp.float32)[None, :]                  # (1, L)
    hmask = ((pos < hw) & (pos % w != (w - 1))).astype(jnp.float32)[None, :]  # (1, L)

    cost = pl.CostEstimate(
        flops=8 * nc * hw,
        transcendentals=0,
        bytes_accessed=nc_pad * row_bytes + 2 * l_pad * 4
        + num_blocks * 2 * _LANES * 4,
    )

    kernel = functools.partial(_tv_kernel, w=w, l_pad=l_pad)
    partials = pl.pallas_call(
        kernel,
        out_shape=jax.ShapeDtypeStruct((num_blocks, 2, _LANES), jnp.float32),
        grid_spec=pltpu.PrefetchScalarGridSpec(
            num_scalar_prefetch=0,
            grid=(num_blocks,),
            in_specs=[
                pl.BlockSpec((1, l_pad), lambda i: (0, 0)),    # vmask (resident)
                pl.BlockSpec((1, l_pad), lambda i: (0, 0)),    # hmask (resident)
                pl.BlockSpec((tb, l_pad), lambda i: (i, 0)),   # fused image rows
            ],
            out_specs=pl.BlockSpec((1, 2, _LANES), lambda i: (i, 0, 0)),
        ),
        compiler_params=pltpu.CompilerParams(
            dimension_semantics=("parallel",),
            vmem_limit_bytes=vmem_limit,
        ),
        cost_estimate=cost,
    )(vmask, hmask, x)

    # Per-block partial sums (lane 0 holds the scalar); final reduce + means.
    v_total = jnp.sum(partials[:, 0, 0])
    h_total = jnp.sum(partials[:, 1, 0])
    v_count = nc * (h - 1) * w     # elements in the vertical-diff tensor
    h_count = nc * h * (w - 1)     # elements in the horizontal-diff tensor
    return v_total / v_count + h_total / h_count


if __name__ == "__main__":
    key = jax.random.PRNGKey(0)

    def ref_tv(im):
        return (jnp.mean(jnp.abs(im[:, :, :-1, :] - im[:, :, 1:, :]))
                + jnp.mean(jnp.abs(im[:, :, :, :-1] - im[:, :, :, 1:])))

    k1, k2 = jax.random.split(key)

    img1 = jax.random.normal(k1, (2, 4, 16, 16), dtype=jnp.float32)
    out1 = jax.block_until_ready(tv_loss(img1))
    r1 = ref_tv(img1)
    assert jnp.allclose(out1, r1, rtol=1e-5, atol=1e-5), (out1, r1)

    # Odd spatial sizes exercise the lane-padding + row/column mask paths.
    img2 = jax.random.normal(k2, (2, 3, 15, 17), dtype=jnp.float32)
    out2 = jax.block_until_ready(tv_loss(img2))
    r2 = ref_tv(img2)
    assert jnp.allclose(out2, r2, rtol=1e-5, atol=1e-5), (out2, r2)

    print("KERNEL_OK")
</pallas_src>

<mosaic_0001>
module attributes {stable_mosaic.version = 11 : i64} {
  func.func @_tv_kernel(%arg0: i32, %arg1: memref<1x256xf32, #tpu.memory_space<vmem>>, %arg2: memref<1x256xf32, #tpu.memory_space<vmem>>, %arg3: memref<8x256xf32, #tpu.memory_space<vmem>>, %arg4: memref<1x2x128xf32, #tpu.memory_space<vmem>>) attributes {dimension_semantics = [#tpu.dimension_semantics<parallel>], iteration_bounds = array<i64: 1>, scalar_prefetch = 0 : i64, scratch_operands = 0 : i64, tpu.core_type = #tpu.core_type<tc>, window_params = [{pipeline_mode = #tpu.pipeline_mode<synchronous>, transform_indices = @transform_0, window_bounds = array<i64: 1, 256>}, {pipeline_mode = #tpu.pipeline_mode<synchronous>, transform_indices = @transform_1, window_bounds = array<i64: 1, 256>}, {transform_indices = @transform_2, window_bounds = array<i64: 8, 256>}, {transform_indices = @transform_3, window_bounds = array<i64: 1, 2, 128>}]} {
    %c0 = arith.constant 0 : index
    %c0_0 = arith.constant 0 : index
    %0 = vector.load %arg3[%c0, %c0_0] : memref<8x256xf32, #tpu.memory_space<vmem>>, vector<8x256xf32>
    %c240_i32 = arith.constant 240 : i32
    %1 = tpu.dynamic_rotate %0 by %c240_i32 dim 1 : vector<8x256xf32>, i32 -> vector<8x256xf32>
    %c255_i32 = arith.constant 255 : i32
    %2 = tpu.dynamic_rotate %0 by %c255_i32 dim 1 : vector<8x256xf32>, i32 -> vector<8x256xf32>
    %3 = arith.subf %1, %0 : vector<8x256xf32>
    %4 = math.absf %3 : vector<8x256xf32>
    %c0_1 = arith.constant 0 : index
    %c0_2 = arith.constant 0 : index
    %5 = vector.load %arg1[%c0_1, %c0_2] : memref<1x256xf32, #tpu.memory_space<vmem>>, vector<1x256xf32>
    %6 = vector.broadcast %5 : vector<1x256xf32> to vector<8x256xf32>
    %7 = arith.mulf %4, %6 : vector<8x256xf32>
    %8 = arith.subf %2, %0 : vector<8x256xf32>
    %9 = math.absf %8 : vector<8x256xf32>
    %c0_3 = arith.constant 0 : index
    %c0_4 = arith.constant 0 : index
    %10 = vector.load %arg2[%c0_3, %c0_4] : memref<1x256xf32, #tpu.memory_space<vmem>>, vector<1x256xf32>
    %11 = vector.broadcast %10 : vector<1x256xf32> to vector<8x256xf32>
    %12 = arith.mulf %9, %11 : vector<8x256xf32>
    %13 = vector.shape_cast %7 : vector<8x256xf32> to vector<1x8x256xf32>
    %cst = arith.constant dense<0.000000e+00> : vector<1xf32>
    %14 = vector.multi_reduction <add>, %13, %cst [1, 2] : vector<1x8x256xf32> to vector<1xf32>
    %15 = vector.shape_cast %14 : vector<1xf32> to vector<1x1x1xf32>
    %16 = vector.extract %15[0, 0, 0] : f32 from vector<1x1x1xf32>
    %17 = vector.shape_cast %12 : vector<8x256xf32> to vector<1x8x256xf32>
    %cst_5 = arith.constant dense<0.000000e+00> : vector<1xf32>
    %18 = vector.multi_reduction <add>, %17, %cst_5 [1, 2] : vector<1x8x256xf32> to vector<1xf32>
    %19 = vector.shape_cast %18 : vector<1xf32> to vector<1x1x1xf32>
    %20 = vector.extract %19[0, 0, 0] : f32 from vector<1x1x1xf32>
    %21 = vector.broadcast %16 : f32 to vector<1x128xf32>
    %22 = vector.broadcast %20 : f32 to vector<1x128xf32>
    %23 = tpu.concatenate %21, %22 in 0 : vector<1x128xf32>, vector<1x128xf32> -> vector<2x128xf32>
    %24 = vector.shape_cast %23 : vector<2x128xf32> to vector<1x2x128xf32>
    %c0_6 = arith.constant 0 : index
    %c0_7 = arith.constant 0 : index
    %c0_8 = arith.constant 0 : index
    %25 = vector.load %arg4[%c0_6, %c0_7, %c0_8] : memref<1x2x128xf32, #tpu.memory_space<vmem>>, vector<1x2x128xf32>
    tpu.vector_store %arg4[%c0_6, %c0_7, %c0_8], %24 {strides = array<i32>} : memref<1x2x128xf32, #tpu.memory_space<vmem>>, vector<1x2x128xf32>,
    return
  }
  func.func @transform_0(%arg0: i32) -> (i32, i32) {
    %c0_i32 = arith.constant 0 : i32
    %c0_i32_0 = arith.constant 0 : i32
    %c0_i32_1 = arith.constant 0 : i32
    return %c0_i32, %c0_i32_0 : i32, i32
  }
  func.func @transform_1(%arg0: i32) -> (i32, i32) {
    %c0_i32 = arith.constant 0 : i32
    %c0_i32_0 = arith.constant 0 : i32
    %c0_i32_1 = arith.constant 0 : i32
    return %c0_i32, %c0_i32_0 : i32, i32
  }
  func.func @transform_2(%arg0: i32) -> (i32, i32) {
    %c0_i32 = arith.constant 0 : i32
    %c0_i32_0 = arith.constant 0 : i32
    return %arg0, %c0_i32 : i32, i32
  }
  func.func @transform_3(%arg0: i32) -> (i32, i32, i32) {
    %c0_i32 = arith.constant 0 : i32
    %c0_i32_0 = arith.constant 0 : i32
    %c0_i32_1 = arith.constant 0 : i32
    return %arg0, %c0_i32, %c0_i32_0 : i32, i32, i32
  }
}

</mosaic_0001>

<llo_original>
// kernel: tpu_custom_call.1
$region0: #{tpu_custom_call.1}
  #allocation0 [shape = 'u32[]', space=smem, size = 0x4, offset = 0x4, fixed_abs, tag = 'smem constant byte address 0x4 - core index']
  #allocation1 [shape = 'u32[144,128]{1,0:T(1,128)}', space=vmem, size = 0x12000, scoped, tag = 'internal scratch']
  %s0 = inlined_call_operand.hbm [shape: f32[1,256], index: 0, kind: input, shape index: {}]
  %s1 = inlined_call_operand.vmem [shape: f32[1,256], index: 1, kind: input, shape index: {}]
  %s2 = inlined_call_operand.hbm [shape: f32[8,256], index: 2, kind: input, shape index: {}]
  %s3 = inlined_call_operand.hbm [shape: f32[1,2,128], index: 3, kind: output, shape index: {}]
  %s4 = sld [smem:[#allocation0]]
  $region30: #{tpu_custom_call.1} parent=0
    _
  %s6 = ssub.s32 1, %s4
  %s7 = scalar_select 0, %s6, %s4
  $region1: #{tpu_custom_call.1} parent=0
    #allocation2 [shape = 'u8[1024]{0}', space=vmem, size = 0x400, scoped, tag = 'input window, operand 0, single buffered']
    #allocation3 [shape = 's32[1]{0}', space=sflag, size = 0x4, scoped, tag = 'scoped memory for tpu_custom_call.1']
    #allocation4 [shape = 's32[1]{0}', space=sflag, size = 0x4, scoped, tag = 'scoped memory for tpu_custom_call.1']
    #allocation5 [shape = 'u8[8192]{0}', space=vmem, size = 0x2000, scoped, tag = 'input window, operand 2, single buffered']
    #allocation6 [shape = 's32[1]{0}', space=sflag, size = 0x4, scoped, tag = 'scoped memory for tpu_custom_call.1']
    #allocation7 [shape = 'u8[1024]{0}', space=vmem, size = 0x400, scoped, tag = 'output window, operand 0, single buffered']
    %8 = vsyncpa [#allocation3], 0
    %9 = vsyncpa [#allocation6], 0
    %10 = vsyncpa [#allocation4], 0
    // Predicated region
    $region2: #{tpu_custom_call.1} parent=1 // pred_check
      _
    $region3: #{tpu_custom_call.1} parent=1 // pred_check_branch
      %12 = sbr.rel (0) target = $region5
    $region4: #{tpu_custom_call.1} parent=1 // pred_region
      %s14 = ssub.s32 32, 32
      %15 = vsyncadd [#allocation3], %s14
      %s17 = sshll.u32 [#allocation2], 4
      %s18 = int_to_ptr.vmem [resolvable:$true] %s17
      %20 = dma.hbm_to_vmem [thread:$0]  %s0, 32, %s18, [#allocation3]
    $region5: #{tpu_custom_call.1} parent=1 // pred_fallthru
      _
    // Predicated region
    $region6: #{tpu_custom_call.1} parent=1 // pred_check
      _
    $region7: #{tpu_custom_call.1} parent=1 // pred_check_branch
      %22 = sbr.rel (0) target = $region9
    $region8: #{tpu_custom_call.1} parent=1 // pred_region
      _
    $region9: #{tpu_custom_call.1} parent=1 // pred_fallthru
      _
    // Predicated region
    $region10: #{tpu_custom_call.1} parent=1 // pred_check
      _
    $region11: #{tpu_custom_call.1} parent=1 // pred_check_branch
      %24 = sbr.rel (0) target = $region13
    $region12: #{tpu_custom_call.1} parent=1 // pred_region
      %s26 = ssub.s32 256, 256
      %27 = vsyncadd [#allocation6], %s26
      %s29 = sshll.u32 [#allocation5], 4
      %s30 = int_to_ptr.vmem [resolvable:$true] %s29
      %32 = dma.hbm_to_vmem [thread:$0]  %s2, 256, %s30, [#allocation6]
    $region13: #{tpu_custom_call.1} parent=1 // pred_fallthru
      _
    // Predicated region
    $region14: #{tpu_custom_call.1} parent=1 // pred_check
      _
    $region15: #{tpu_custom_call.1} parent=1 // pred_check_branch
      %34 = sbr.rel (0) target = $region17
    $region16: #{tpu_custom_call.1} parent=1 // pred_region
      %35 = dma.done [#allocation3], 32
    $region17: #{tpu_custom_call.1} parent=1 // pred_fallthru
      _
    // Predicated region
    $region18: #{tpu_custom_call.1} parent=1 // pred_check
      _
    $region19: #{tpu_custom_call.1} parent=1 // pred_check_branch
      %37 = sbr.rel (0) target = $region21
    $region20: #{tpu_custom_call.1} parent=1 // pred_region
      %38 = dma.done [#allocation6], 256
    $region21: #{tpu_custom_call.1} parent=1 // pred_fallthru
      _
    %v39 = vld [vmem:[#allocation5] sm:$0xff]
    %v40 = vld [vmem:[#allocation5 + $0x8] sm:$0xff]
    %41 = vrot.lane.b32.xlu0 %v39, 112
    %v42 = vpop.permute.xlu0 %41
    %43 = vrot.lane.b32.xlu0 %v40, 112
    %v44 = vpop.permute.xlu0 %43
    %v45 = vlaneseq
    %v46 = vand.u32 %v45, 127
    %vm47 = vcmp.lt.s32.totalorder %v46, 112
    %v48 = vsel %vm47, %v42, %v44
    %v49 = vsel %vm47, %v44, %v42
    %50 = vrot.lane.b32.xlu0 %v39, 127
    %v51 = vpop.permute.xlu0 %50
    %52 = vrot.lane.b32.xlu0 %v40, 127
    %v53 = vpop.permute.xlu0 %52
    %vm54 = vcmp.lt.s32.totalorder %v46, 127
    %v55 = vsel %vm54, %v51, %v53
    %v56 = vsel %vm54, %v53, %v51
    %v57 = vsub.f32 %v48, %v39
    %v58 = vsub.f32 %v49, %v40
    %v59 = vand.u32 2147483647, %v57
    %v60 = vand.u32 2147483647, %v58
    %v61 = vld [vmem:[#allocation2] sm:$0x3]
    %v63 = vlaneseq
    %v64 = vshrl.u32 %v63, 7
    %v65 = vsub.s32 0, %v64
    %v66 = vrot.slane %v61, %v65
    %v67 = vlaneseq
    %v68 = vshrl.u32 %v67, 7
    %v69 = vsub.s32 1, %v68
    %v70 = vrot.slane %v61, %v69
    %v73 = vmul.f32 %v59, %v66
    %v74 = vmul.f32 %v60, %v70
    %v75 = vsub.f32 %v55, %v39
    %v76 = vsub.f32 %v56, %v40
    %v77 = vand.u32 2147483647, %v75
    %v78 = vand.u32 2147483647, %v76
    %v79 = vld [vmem:[%s1] sm:$0x3]
    %v81 = vlaneseq
    %v82 = vshrl.u32 %v81, 7
    %v83 = vsub.s32 0, %v82
    %v84 = vrot.slane %v79, %v83
    %v85 = vlaneseq
    %v86 = vshrl.u32 %v85, 7
    %v87 = vsub.s32 1, %v86
    %v88 = vrot.slane %v79, %v87
    %v91 = vmul.f32 %v77, %v84
    %v92 = vmul.f32 %v78, %v88
    %v93 = vadd.f32 %v73, %v74
    %94 = vadd.xlane.f32.xlu0 %v93
    %v95 = vpop.xlane.xlu0 %94
    %v96 = vrot.slane %v95, 4
    %v97 = vadd.f32 %v95, %v96
    %v98 = vrot.slane %v97, 2
    %v99 = vadd.f32 %v97, %v98
    %v100 = vrot.slane %v99, 1
    %v101 = vadd.f32 %v99, %v100
    %s102 = vtos %v101
    %v103 = vadd.f32 %v91, %v92
    %104 = vadd.xlane.f32.xlu0 %v103
    %v105 = vpop.xlane.xlu0 %104
    %v106 = vrot.slane %v105, 4
    %v107 = vadd.f32 %v105, %v106
    %v108 = vrot.slane %v107, 2
    %v109 = vadd.f32 %v107, %v108
    %v110 = vrot.slane %v109, 1
    %v111 = vadd.f32 %v109, %v110
    %s112 = vtos %v111
    %v113 = vstv %s102
    %v114 = vstv %s112
    %vm115 = vcmask 1040384
    %v116 = vsel %vm115, %v113, %v114
    %117 = vst [vmem:[#allocation7] sm:$0x3] %v116
    // Predicated region
    $region22: #{tpu_custom_call.1} parent=1 // pred_check
      _
    $region23: #{tpu_custom_call.1} parent=1 // pred_check_branch
      %119 = sbr.rel (0) target = $region25
    $region24: #{tpu_custom_call.1} parent=1 // pred_region
      %s121 = ssub.s32 32, 32
      %122 = vsyncadd [#allocation4], %s121
      %s124 = sshll.u32 [#allocation7], 4
      %s125 = int_to_ptr.vmem [resolvable:$true] %s124
      %127 = dma.vmem_to_hbm [thread:$0]  %s125, 32, %s3, [#allocation4]
    $region25: #{tpu_custom_call.1} parent=1 // pred_fallthru
      _
    // Predicated region
    $region26: #{tpu_custom_call.1} parent=1 // pred_check
      _
    $region27: #{tpu_custom_call.1} parent=1 // pred_check_branch
      %129 = sbr.rel (0) target = $region29
    $region28: #{tpu_custom_call.1} parent=1 // pred_region
      %130 = dma.done [#allocation4], 32
    $region29: #{tpu_custom_call.1} parent=1 // pred_fallthru
      _
    %131 = vsyncpa [#allocation3], 1
    %132 = vsyncpa [#allocation6], 1
    %133 = vsyncpa [#allocation4], 1

</llo_original>
